<compile_context>
chip_gen: v6e
topology: v6e:2x2x1
jax: 0.10.0
libtpu: 0.0.40
codegen_flags: <defaults>
</compile_context>

<pallas_src>
import functools
import math

import jax
import jax.numpy as jnp
from jax.experimental import pallas as pl
from jax.experimental.pallas import tpu as pltpu


def _round_up(x, m):
    return ((x + m - 1) // m) * m


def _vmem_limit_bytes():
    # Generation-aware: do NOT hard-code 64 MiB (that is all of v7x physical VMEM).
    try:
        cap = pltpu.get_tpu_info().vmem_capacity_bytes
    except Exception:
        cap = 64 << 20
    return int(min(cap * 3 // 4, 96 << 20))


def _stage2_vmem_bytes(tq, tk, fp, mm_bytes):
    """Static per-step VMEM budget for the Stage-2 working set."""
    adj = 2 * tq * tk * 1                # int8 adjacency tile, double buffered
    wh = 2 * tk * fp * mm_bytes          # Wh key tile, double buffered
    f2 = 2 * tk * 4                      # f2 row tile
    f1 = 2 * tq * 4                      # f1 column tile
    out = 2 * tq * fp * 4                # output tile (generous)
    acc = tq * fp * 4 + tq * 4           # accumulator scratch
    tmp = 3 * tq * tk * 4                # e / exp / select temporaries
    return adj + wh + f2 + f1 + out + acc + tmp


def _choose_tk(n0, tq, fp, mm_bytes, max_tk, vmem_limit):
    """Largest key tile (multiple of tq, <= max_tk) dividing n0 that fits VMEM."""
    best = tq
    cand = tq
    while cand <= min(max_tk, n0):
        if n0 % cand == 0 and _stage2_vmem_bytes(tq, cand, fp, mm_bytes) <= vmem_limit:
            best = cand
        cand += tq
    return best


# ----------------------------------------------------------------------------
# Stage 1: Wh = h @ W ; f1 = Wh . a1 ; f2 = Wh . a2   (row-tiled, pipelined)
# ----------------------------------------------------------------------------
def _precompute_kernel(h_ref, w_ref, a1_ref, a2_ref, wh_ref, f12_ref):
    # h/W were pre-cast to mm_dtype in the wrapper -> no per-step cast here.
    wh = jnp.dot(h_ref[...], w_ref[...],
                 preferred_element_type=jnp.float32)          # (tq, fp)  MXU
    wh_ref[...] = wh.astype(wh_ref.dtype)                     # bf16 store on bf16 path
    # Attention projections as VPU multiply + lane reduction (no 1-lane MXU matvec).
    f12_ref[:, 0:1] = jnp.sum(wh * a1_ref[...], axis=-1, keepdims=True)
    f12_ref[:, 1:2] = jnp.sum(wh * a2_ref[...], axis=-1, keepdims=True)


# ----------------------------------------------------------------------------
# Stage 2: masked attention + key-tiled aggregation with VMEM accumulators
# ----------------------------------------------------------------------------
def _attention_kernel(bids_ref, cnts_ref, adj_ref, f1_ref, f2_ref, wh_ref,
                      out_ref, acc_ref, den_ref, *, alpha, concat, mm_dtype):
    # bids/cnts: SMEM block-CSR metadata (scalar prefetch)
    # adj_ref: (tq, tk) int8   f1_ref: (tq, 1)   f2_ref: (1, tk)
    # wh_ref : (tk, fp) mm_dtype key tile        out_ref: (tq, fp) lane-dense
    i = pl.program_id(0)
    k = pl.program_id(1)

    @pl.when(k == 0)
    def _():
        acc_ref[...] = jnp.zeros_like(acc_ref)
        den_ref[...] = jnp.zeros_like(den_ref)

    # Only nonzero adjacency blocks contribute (block-CSR skip).
    @pl.when(k < cnts_ref[i])
    def _():
        e = f1_ref[...] + f2_ref[...]                  # (tq, tk)
        e = jnp.where(e >= 0.0, e, alpha * e)          # LeakyReLU(alpha)
        # TODO(synk): bf16 exp roughly doubles EUP throughput on v6e/v7x; kept
        # f32 here for accuracy and v5e compatibility (no bf16 EUP there).
        s = jnp.where(adj_ref[...] != 0, jnp.exp(-e), 0.0)   # no f32 mask temp
        den_ref[...] += jnp.sum(s, axis=-1, keepdims=True)
        acc_ref[...] += jnp.dot(s.astype(mm_dtype), wh_ref[...],
                                preferred_element_type=jnp.float32)   # MXU

    @pl.when(k == pl.num_programs(1) - 1)
    def _():
        rowsum = den_ref[...]
        # Rows with no edges (only padding rows here) stay finite; sliced off.
        denom = jnp.where(rowsum > 0.0, rowsum, 1.0)
        hp = acc_ref[...] * pl.reciprocal(denom, approx=False)
        if concat:
            # ELU; clamp before exp so the unselected branch cannot overflow.
            hp = jnp.where(hp > 0.0, hp, jnp.exp(jnp.minimum(hp, 0.0)) - 1.0)
        out_ref[...] = hp.astype(out_ref.dtype)


# ----------------------------------------------------------------------------
# Wrapper: SpGraphAttentionLayer.forward
# ----------------------------------------------------------------------------
def sp_gat_layer(h, adj, W, a, *, alpha, concat, mm_dtype=jnp.float32,
                 tq=128, max_tk=512):
    """Forward pass of SpGraphAttentionLayer via two Pallas TPU kernels.

    h   : (N, in_features)      node features
    adj : (N, N)                adjacency (any nonzero entry = edge)
    W   : (in_features, out_features)
    a   : (1, 2 * out_features) attention vector
    """
    N, f_in = h.shape
    f_out = W.shape[1]
    assert a.shape == (1, 2 * f_out)
    assert tq % 32 == 0  # int8 adjacency sublane tiling

    f32 = jnp.float32
    fin_pad = _round_up(f_in, 128)
    fp = _round_up(f_out, 128)                       # lane-dense output slab
    n_pad = _round_up(max(N, tq), tq)

    vmem_limit = _vmem_limit_bytes()
    mm_bytes = jnp.dtype(mm_dtype).itemsize
    tk = _choose_tk(n_pad, tq, fp, mm_bytes, max_tk, vmem_limit)
    nqt = n_pad // tq
    nkt = n_pad // tk

    # --- pad & pre-cast inputs once (bf16 end-to-end on the bf16 path) -------
    h_p = jnp.zeros((n_pad, fin_pad), f32).at[:N, :f_in].set(
        h.astype(f32)).astype(mm_dtype)
    w_p = jnp.zeros((fin_pad, fp), f32).at[:f_in, :f_out].set(
        W.astype(f32)).astype(mm_dtype)
    a1_p = jnp.zeros((1, fp), f32).at[:, :f_out].set(a[:, :f_out].astype(f32))
    a2_p = jnp.zeros((1, fp), f32).at[:, :f_out].set(a[:, f_out:].astype(f32))
    adj_m = jnp.zeros((n_pad, n_pad), jnp.int8).at[:N, :N].set(
        (adj != 0).astype(jnp.int8))

    # ---- Stage 1 -------------------------------------------------------------
    cparams1 = pltpu.CompilerParams(dimension_semantics=("parallel",),
                                    vmem_limit_bytes=vmem_limit)

    def run_stage1(single_buffer_residents):
        res_kwargs = {}
        if single_buffer_residents and hasattr(pl, "Buffered"):
            # Constant-index residents: no point double-buffering them.
            res_kwargs = dict(pipeline_mode=pl.Buffered(1))
        return pl.pallas_call(
            _precompute_kernel,
            grid=(nqt,),
            in_specs=[
                pl.BlockSpec((tq, fin_pad), lambda i: (i, 0)),             # h tile
                pl.BlockSpec((fin_pad, fp), lambda i: (0, 0), **res_kwargs),  # W
                pl.BlockSpec((1, fp), lambda i: (0, 0), **res_kwargs),        # a1
                pl.BlockSpec((1, fp), lambda i: (0, 0), **res_kwargs),        # a2
            ],
            out_specs=[
                pl.BlockSpec((tq, fp), lambda i: (i, 0)),
                pl.BlockSpec((tq, 2), lambda i: (i, 0)),
            ],
            out_shape=[
                jax.ShapeDtypeStruct((n_pad, fp), mm_dtype),   # Wh in mm_dtype
                jax.ShapeDtypeStruct((n_pad, 2), f32),         # merged f1/f2
            ],
            compiler_params=cparams1,
        )(h_p, w_p, a1_p, a2_p)

    try:
        wh, f12 = run_stage1(True)
    except Exception:
        # pipeline_mode / Buffered(1) unsupported on this jax: plain specs.
        wh, f12 = run_stage1(False)

    f1 = f12[:, 0:1]                        # (n_pad, 1)
    f2_row = f12[:, 1].reshape(1, n_pad)    # (1, n_pad) — single cheap XLA relayout

    # ---- block-CSR metadata: which (tq x tk) adjacency blocks are nonzero ----
    blk_nz = adj_m.reshape(nqt, tq, nkt, tk).astype(jnp.int32).sum(axis=(1, 3)) > 0
    counts = blk_nz.sum(axis=1).astype(jnp.int32)                         # (nqt,)
    order = jnp.argsort(jnp.logical_not(blk_nz), axis=1).astype(jnp.int32)  # nonzero first
    last = jnp.take_along_axis(order, jnp.maximum(counts - 1, 0)[:, None], axis=1)
    k_ids = jnp.arange(nkt, dtype=jnp.int32)[None, :]
    block_ids = jnp.where(k_ids < counts[:, None], order, last)           # (nqt, nkt)

    # ---- Stage 2 -------------------------------------------------------------
    cparams2 = pltpu.CompilerParams(
        dimension_semantics=("parallel", "arbitrary"),   # queries parallel, keys last
        vmem_limit_bytes=vmem_limit)

    out = pl.pallas_call(
        functools.partial(_attention_kernel, alpha=alpha, concat=concat,
                          mm_dtype=mm_dtype),
        grid_spec=pltpu.PrefetchScalarGridSpec(
            num_scalar_prefetch=2,
            grid=(nqt, nkt),
            in_specs=[
                pl.BlockSpec((tq, tk), lambda i, k, bids, cnts: (i, bids[i, k])),
                pl.BlockSpec((tq, 1), lambda i, k, bids, cnts: (i, 0)),
                pl.BlockSpec((1, tk), lambda i, k, bids, cnts: (0, bids[i, k])),
                pl.BlockSpec((tk, fp), lambda i, k, bids, cnts: (bids[i, k], 0)),
            ],
            out_specs=pl.BlockSpec((tq, fp), lambda i, k, bids, cnts: (i, 0)),
            scratch_shapes=[pltpu.VMEM((tq, fp), jnp.float32),   # hp accumulator
                            pltpu.VMEM((tq, 1), jnp.float32)],   # rowsum accumulator
        ),
        out_shape=jax.ShapeDtypeStruct((n_pad, fp), f32),
        compiler_params=cparams2,
    )(block_ids, counts, adj_m, f1, f2_row, wh)

    return out[:N, :f_out]


# ----------------------------------------------------------------------------
# Pure-JAX reference (same math as the PyTorch module, dense-mask form)
# ----------------------------------------------------------------------------
def _ref_sp_gat_layer(h, adj, W, a, alpha, concat):
    f_out = W.shape[1]
    wh = h @ W
    f1 = jnp.sum(wh * a[:, :f_out], axis=-1, keepdims=True)   # (N, 1)
    f2 = jnp.sum(wh * a[:, f_out:], axis=-1, keepdims=True)   # (N, 1)
    e = f1 + f2.T
    e = jnp.where(e >= 0.0, e, alpha * e)
    s = jnp.where(adj != 0, jnp.exp(-e), 0.0)
    rowsum = jnp.sum(s, axis=1, keepdims=True)
    hp = (s @ wh) / rowsum
    return jax.nn.elu(hp) if concat else hp


# ----------------------------------------------------------------------------
# Parameter init (xavier_normal_ with gain=1.414, like the module __init__)
# ----------------------------------------------------------------------------
def xavier_normal(key, shape, gain):
    std = gain * math.sqrt(2.0 / (shape[0] + shape[1]))
    return std * jax.random.normal(key, shape, jnp.float32)


# ----------------------------------------------------------------------------
if __name__ == "__main__":
    key = jax.random.PRNGKey(0)
    k_w, k_a, k_x, k_adj, k_x2, k_adj2 = jax.random.split(key, 6)

    in_features = 32
    out_features = 16
    alpha = 0.2       # LeakyReLU slope

    W = xavier_normal(k_w, (in_features, out_features), 1.414)
    a = xavier_normal(k_a, (1, 2 * out_features), 1.414)

    # --- Test 1: small dense-ish graph (single tile) --------------------------
    N = 16
    x = jax.random.normal(k_x, (N, in_features), jnp.float32)
    adj = (jax.random.uniform(k_adj, (N, N)) > 0.5).astype(jnp.float32)
    adj = jnp.maximum(adj, jnp.eye(N, dtype=jnp.float32))      # self-loops

    for concat in (True, False):
        out = jax.block_until_ready(
            sp_gat_layer(x, adj, W, a, alpha=alpha, concat=concat))
        ref = jax.block_until_ready(
            _ref_sp_gat_layer(x, adj, W, a, alpha, concat))
        assert out.shape == (N, out_features)
        assert jnp.allclose(out, ref, atol=5e-4, rtol=5e-4), (
            f"concat={concat} max abs diff {jnp.max(jnp.abs(out - ref))}")

    # --- Test 2: larger banded (sparse) graph: exercises multi-tile key loop
    #             and the block-CSR skipping of empty adjacency blocks. --------
    N2 = 600
    x2 = jax.random.normal(k_x2, (N2, in_features), jnp.float32)
    idx = jnp.arange(N2)
    band = (jnp.abs(idx[:, None] - idx[None, :]) <= 40).astype(jnp.float32)
    rnd = (jax.random.uniform(k_adj2, (N2, N2)) > 0.5).astype(jnp.float32)
    adj2 = jnp.maximum(band * rnd, jnp.eye(N2, dtype=jnp.float32))

    out2 = jax.block_until_ready(
        sp_gat_layer(x2, adj2, W, a, alpha=alpha, concat=True))
    ref2 = jax.block_until_ready(
        _ref_sp_gat_layer(x2, adj2, W, a, alpha, True))
    assert out2.shape == (N2, out_features)
    assert jnp.allclose(out2, ref2, atol=5e-4, rtol=5e-4), (
        f"sparse max abs diff {jnp.max(jnp.abs(out2 - ref2))}")

    # --- Test 3: bf16 MXU-input path (v6e/v7x optimization), f32 accumulation -
    out_bf16 = jax.block_until_ready(
        sp_gat_layer(x, adj, W, a, alpha=alpha, concat=True,
                     mm_dtype=jnp.bfloat16))
    ref = _ref_sp_gat_layer(x, adj, W, a, alpha, True)
    assert jnp.allclose(out_bf16, ref, atol=1e-1, rtol=1e-1), (
        f"bf16 max abs diff {jnp.max(jnp.abs(out_bf16 - ref))}")

    print("KERNEL_OK")
</pallas_src>

<mosaic_0001>
module attributes {stable_mosaic.version = 11 : i64} {
  func.func @_precompute_kernel(%arg0: i32, %arg1: memref<128x128xf32, #tpu.memory_space<vmem>>, %arg2: memref<128x128xf32, #tpu.memory_space<vmem>>, %arg3: memref<1x128xf32, #tpu.memory_space<vmem>>, %arg4: memref<1x128xf32, #tpu.memory_space<vmem>>, %arg5: memref<128x128xf32, #tpu.memory_space<vmem>>, %arg6: memref<128x2xf32, #tpu.memory_space<vmem>>) attributes {dimension_semantics = [#tpu.dimension_semantics<parallel>], iteration_bounds = array<i64: 1>, scalar_prefetch = 0 : i64, scratch_operands = 0 : i64, tpu.core_type = #tpu.core_type<tc>, window_params = [{transform_indices = @transform_0, window_bounds = array<i64: 128, 128>}, {pipeline_mode = #tpu.pipeline_mode<synchronous>, transform_indices = @transform_1, window_bounds = array<i64: 128, 128>}, {pipeline_mode = #tpu.pipeline_mode<synchronous>, transform_indices = @transform_2, window_bounds = array<i64: 1, 128>}, {pipeline_mode = #tpu.pipeline_mode<synchronous>, transform_indices = @transform_3, window_bounds = array<i64: 1, 128>}, {transform_indices = @transform_4, window_bounds = array<i64: 128, 128>}, {transform_indices = @transform_5, window_bounds = array<i64: 128, 2>}]} {
    %c0 = arith.constant 0 : index
    %c0_0 = arith.constant 0 : index
    %0 = vector.load %arg1[%c0, %c0_0] : memref<128x128xf32, #tpu.memory_space<vmem>>, vector<128x128xf32>
    %c0_1 = arith.constant 0 : index
    %c0_2 = arith.constant 0 : index
    %1 = vector.load %arg2[%c0_1, %c0_2] : memref<128x128xf32, #tpu.memory_space<vmem>>, vector<128x128xf32>
    %cst = arith.constant dense<0.000000e+00> : vector<128x128xf32>
    %2 = tpu.matmul %0, %1, %cst {dimension_numbers = #tpu.dot_dimension_numbers<[1], [0], [0], [1], [0, 0, 1, 1], [], []>} : vector<128x128xf32>, vector<128x128xf32>, vector<128x128xf32> -> vector<128x128xf32>
    %c0_3 = arith.constant 0 : index
    %c0_4 = arith.constant 0 : index
    %3 = vector.load %arg5[%c0_3, %c0_4] : memref<128x128xf32, #tpu.memory_space<vmem>>, vector<128x128xf32>
    tpu.vector_store %arg5[%c0_3, %c0_4], %2 {strides = array<i32>} : memref<128x128xf32, #tpu.memory_space<vmem>>, vector<128x128xf32>,
    %c0_5 = arith.constant 0 : index
    %c0_6 = arith.constant 0 : index
    %4 = vector.load %arg3[%c0_5, %c0_6] : memref<1x128xf32, #tpu.memory_space<vmem>>, vector<1x128xf32>
    %5 = vector.broadcast %4 : vector<1x128xf32> to vector<128x128xf32>
    %6 = arith.mulf %2, %5 : vector<128x128xf32>
    %cst_7 = arith.constant dense<0.000000e+00> : vector<128xf32>
    %7 = vector.multi_reduction <add>, %6, %cst_7 [1] : vector<128x128xf32> to vector<128xf32>
    %8 = vector.shape_cast %7 : vector<128xf32> to vector<128x1xf32>
    %c0_8 = arith.constant 0 : index
    %c0_9 = arith.constant 0 : index
    %9 = vector.load %arg6[%c0_8, %c0_9] : memref<128x2xf32, #tpu.memory_space<vmem>>, vector<128x1xf32>
    tpu.vector_store %arg6[%c0_8, %c0_9], %8 {strides = array<i32>} : memref<128x2xf32, #tpu.memory_space<vmem>>, vector<128x1xf32>,
    %c0_10 = arith.constant 0 : index
    %c0_11 = arith.constant 0 : index
    %10 = vector.load %arg4[%c0_10, %c0_11] : memref<1x128xf32, #tpu.memory_space<vmem>>, vector<1x128xf32>
    %11 = vector.broadcast %10 : vector<1x128xf32> to vector<128x128xf32>
    %12 = arith.mulf %2, %11 : vector<128x128xf32>
    %cst_12 = arith.constant dense<0.000000e+00> : vector<128xf32>
    %13 = vector.multi_reduction <add>, %12, %cst_12 [1] : vector<128x128xf32> to vector<128xf32>
    %14 = vector.shape_cast %13 : vector<128xf32> to vector<128x1xf32>
    %c0_13 = arith.constant 0 : index
    %c1 = arith.constant 1 : index
    %15 = vector.load %arg6[%c0_13, %c1] : memref<128x2xf32, #tpu.memory_space<vmem>>, vector<128x1xf32>
    tpu.vector_store %arg6[%c0_13, %c1], %14 {strides = array<i32>} : memref<128x2xf32, #tpu.memory_space<vmem>>, vector<128x1xf32>,
    return
  }
  func.func @transform_0(%arg0: i32) -> (i32, i32) {
    %c0_i32 = arith.constant 0 : i32
    %c0_i32_0 = arith.constant 0 : i32
    return %arg0, %c0_i32 : i32, i32
  }
  func.func @transform_1(%arg0: i32) -> (i32, i32) {
    %c0_i32 = arith.constant 0 : i32
    %c0_i32_0 = arith.constant 0 : i32
    %c0_i32_1 = arith.constant 0 : i32
    return %c0_i32, %c0_i32_0 : i32, i32
  }
  func.func @transform_2(%arg0: i32) -> (i32, i32) {
    %c0_i32 = arith.constant 0 : i32
    %c0_i32_0 = arith.constant 0 : i32
    %c0_i32_1 = arith.constant 0 : i32
    return %c0_i32, %c0_i32_0 : i32, i32
  }
  func.func @transform_3(%arg0: i32) -> (i32, i32) {
    %c0_i32 = arith.constant 0 : i32
    %c0_i32_0 = arith.constant 0 : i32
    %c0_i32_1 = arith.constant 0 : i32
    return %c0_i32, %c0_i32_0 : i32, i32
  }
  func.func @transform_4(%arg0: i32) -> (i32, i32) {
    %c0_i32 = arith.constant 0 : i32
    %c0_i32_0 = arith.constant 0 : i32
    return %arg0, %c0_i32 : i32, i32
  }
  func.func @transform_5(%arg0: i32) -> (i32, i32) {
    %c0_i32 = arith.constant 0 : i32
    %c0_i32_0 = arith.constant 0 : i32
    return %arg0, %c0_i32 : i32, i32
  }
}

module attributes {stable_mosaic.version = 11 : i64} {
  func.func @_precompute_kernel(%arg0: i32, %arg1: memref<128x128xf32, #tpu.memory_space<vmem>>, %arg2: memref<128x128xf32, #tpu.memory_space<vmem>>, %arg3: memref<1x128xf32, #tpu.memory_space<vmem>>, %arg4: memref<1x128xf32, #tpu.memory_space<vmem>>, %arg5: memref<128x128xf32, #tpu.memory_space<vmem>>, %arg6: memref<128x2xf32, #tpu.memory_space<vmem>>) attributes {dimension_semantics = [#tpu.dimension_semantics<parallel>], iteration_bounds = array<i64: 1>, scalar_prefetch = 0 : i64, scratch_operands = 0 : i64, tpu.core_type = #tpu.core_type<tc>, window_params = [{transform_indices = @transform_0, window_bounds = array<i64: 128, 128>}, {pipeline_mode = #tpu.pipeline_mode<synchronous>, transform_indices = @transform_1, window_bounds = array<i64: 128, 128>}, {pipeline_mode = #tpu.pipeline_mode<synchronous>, transform_indices = @transform_2, window_bounds = array<i64: 1, 128>}, {pipeline_mode = #tpu.pipeline_mode<synchronous>, transform_indices = @transform_3, window_bounds = array<i64: 1, 128>}, {transform_indices = @transform_4, window_bounds = array<i64: 128, 128>}, {transform_indices = @transform_5, window_bounds = array<i64: 128, 2>}]} {
    %c0 = arith.constant 0 : index
    %c0_0 = arith.constant 0 : index
    %0 = vector.load %arg1[%c0, %c0_0] : memref<128x128xf32, #tpu.memory_space<vmem>>, vector<128x128xf32>
    %c0_1 = arith.constant 0 : index
    %c0_2 = arith.constant 0 : index
    %1 = vector.load %arg2[%c0_1, %c0_2] : memref<128x128xf32, #tpu.memory_space<vmem>>, vector<128x128xf32>
    %cst = arith.constant dense<0.000000e+00> : vector<128x128xf32>
    %2 = tpu.matmul %0, %1, %cst {dimension_numbers = #tpu.dot_dimension_numbers<[1], [0], [0], [1], [0, 0, 1, 1], [], []>} : vector<128x128xf32>, vector<128x128xf32>, vector<128x128xf32> -> vector<128x128xf32>
    %c0_3 = arith.constant 0 : index
    %c0_4 = arith.constant 0 : index
    %3 = vector.load %arg5[%c0_3, %c0_4] : memref<128x128xf32, #tpu.memory_space<vmem>>, vector<128x128xf32>
    tpu.vector_store %arg5[%c0_3, %c0_4], %2 {strides = array<i32>} : memref<128x128xf32, #tpu.memory_space<vmem>>, vector<128x128xf32>,
    %c0_5 = arith.constant 0 : index
    %c0_6 = arith.constant 0 : index
    %4 = vector.load %arg3[%c0_5, %c0_6] : memref<1x128xf32, #tpu.memory_space<vmem>>, vector<1x128xf32>
    %5 = vector.broadcast %4 : vector<1x128xf32> to vector<128x128xf32>
    %6 = arith.mulf %2, %5 : vector<128x128xf32>
    %cst_7 = arith.constant dense<0.000000e+00> : vector<128xf32>
    %7 = vector.multi_reduction <add>, %6, %cst_7 [1] : vector<128x128xf32> to vector<128xf32>
    %8 = vector.shape_cast %7 : vector<128xf32> to vector<128x1xf32>
    %c0_8 = arith.constant 0 : index
    %c0_9 = arith.constant 0 : index
    %9 = vector.load %arg6[%c0_8, %c0_9] : memref<128x2xf32, #tpu.memory_space<vmem>>, vector<128x1xf32>
    tpu.vector_store %arg6[%c0_8, %c0_9], %8 {strides = array<i32>} : memref<128x2xf32, #tpu.memory_space<vmem>>, vector<128x1xf32>,
    %c0_10 = arith.constant 0 : index
    %c0_11 = arith.constant 0 : index
    %10 = vector.load %arg4[%c0_10, %c0_11] : memref<1x128xf32, #tpu.memory_space<vmem>>, vector<1x128xf32>
    %11 = vector.broadcast %10 : vector<1x128xf32> to vector<128x128xf32>
    %12 = arith.mulf %2, %11 : vector<128x128xf32>
    %cst_12 = arith.constant dense<0.000000e+00> : vector<128xf32>
    %13 = vector.multi_reduction <add>, %12, %cst_12 [1] : vector<128x128xf32> to vector<128xf32>
    %14 = vector.shape_cast %13 : vector<128xf32> to vector<128x1xf32>
    %c0_13 = arith.constant 0 : index
    %c1 = arith.constant 1 : index
    %15 = vector.load %arg6[%c0_13, %c1] : memref<128x2xf32, #tpu.memory_space<vmem>>, vector<128x1xf32>
    tpu.vector_store %arg6[%c0_13, %c1], %14 {strides = array<i32>} : memref<128x2xf32, #tpu.memory_space<vmem>>, vector<128x1xf32>,
    return
  }
  func.func @transform_0(%arg0: i32) -> (i32, i32) {
    %c0_i32 = arith.constant 0 : i32
    %c0_i32_0 = arith.constant 0 : i32
    return %arg0, %c0_i32 : i32, i32
  }
  func.func @transform_1(%arg0: i32) -> (i32, i32) {
    %c0_i32 = arith.constant 0 : i32
    %c0_i32_0 = arith.constant 0 : i32
    %c0_i32_1 = arith.constant 0 : i32
    return %c0_i32, %c0_i32_0 : i32, i32
  }
  func.func @transform_2(%arg0: i32) -> (i32, i32) {
    %c0_i32 = arith.constant 0 : i32
    %c0_i32_0 = arith.constant 0 : i32
    %c0_i32_1 = arith.constant 0 : i32
    return %c0_i32, %c0_i32_0 : i32, i32
  }
  func.func @transform_3(%arg0: i32) -> (i32, i32) {
    %c0_i32 = arith.constant 0 : i32
    %c0_i32_0 = arith.constant 0 : i32
    %c0_i32_1 = arith.constant 0 : i32
    return %c0_i32, %c0_i32_0 : i32, i32
  }
  func.func @transform_4(%arg0: i32) -> (i32, i32) {
    %c0_i32 = arith.constant 0 : i32
    %c0_i32_0 = arith.constant 0 : i32
    return %arg0, %c0_i32 : i32, i32
  }
  func.func @transform_5(%arg0: i32) -> (i32, i32) {
    %c0_i32 = arith.constant 0 : i32
    %c0_i32_0 = arith.constant 0 : i32
    return %arg0, %c0_i32 : i32, i32
  }
}

</mosaic_0001>

<llo_original>
// kernel: tpu_custom_call.1
$region0: #{tpu_custom_call.1}
  #allocation0 [shape = 'u32[]', space=smem, size = 0x4, offset = 0x4, fixed_abs, tag = 'smem constant byte address 0x4 - core index']
  #allocation1 [shape = 'u32[144,128]{1,0:T(1,128)}', space=vmem, size = 0x12000, scoped, tag = 'internal scratch']
  %s0 = inlined_call_operand.hbm [shape: f32[128,128], index: 0, kind: input, shape index: {}]
  %s1 = inlined_call_operand.hbm [shape: f32[128,128], index: 1, kind: input, shape index: {}]
  %s2 = inlined_call_operand.vmem [shape: f32[1,128], index: 2, kind: input, shape index: {}]
  %s3 = inlined_call_operand.vmem [shape: f32[1,128], index: 3, kind: input, shape index: {}]
  %s4 = inlined_call_operand.hbm [shape: f32[128,128], index: 4, kind: output, shape index: {0}]
  %s5 = inlined_call_operand.vmem [shape: f32[128,2], index: 5, kind: output, shape index: {1}]
  %6 = xla_tuple %s4, %s5
  %s7 = sld [smem:[#allocation0]]
  $region42: #{tpu_custom_call.1} parent=0
    _
  %s9 = ssub.s32 1, %s7
  %s10 = scalar_select 0, %s9, %s7
  $region1: #{tpu_custom_call.1} parent=0
    #allocation2 [shape = 'u8[65536]{0}', space=vmem, size = 0x10000, scoped, tag = 'input window, operand 0, single buffered']
    #allocation3 [shape = 's32[1]{0}', space=sflag, size = 0x4, scoped, tag = 'scoped memory for tpu_custom_call.1']
    #allocation4 [shape = 's32[1]{0}', space=sflag, size = 0x4, scoped, tag = 'scoped memory for tpu_custom_call.1']
    #allocation5 [shape = 'u8[65536]{0}', space=vmem, size = 0x10000, scoped, tag = 'input window, operand 1, single buffered']
    #allocation6 [shape = 's32[1]{0}', space=sflag, size = 0x4, scoped, tag = 'scoped memory for tpu_custom_call.1']
    #allocation7 [shape = 'u8[65536]{0}', space=vmem, size = 0x10000, scoped, tag = 'output window, operand 0, single buffered']
    %11 = vsyncpa [#allocation3], 0
    %12 = vsyncpa [#allocation6], 0
    %13 = vsyncpa [#allocation4], 0
    // Predicated region
    $region2: #{tpu_custom_call.1} parent=1 // pred_check
      _
    $region3: #{tpu_custom_call.1} parent=1 // pred_check_branch
      %15 = sbr.rel (0) target = $region5
    $region4: #{tpu_custom_call.1} parent=1 // pred_region
      %s17 = ssub.s32 2048, 2048
      %18 = vsyncadd [#allocation3], %s17
      %s19 = sshll.u32 [#allocation2], 4
      %s20 = int_to_ptr.vmem [resolvable:$true] %s19
      %25 = dma.hbm_to_vmem [thread:$0]  %s0, 2048, %s20, [#allocation3], 128, 128, 8
    $region5: #{tpu_custom_call.1} parent=1 // pred_fallthru
      _
    // Predicated region
    $region6: #{tpu_custom_call.1} parent=1 // pred_check
      _
    $region7: #{tpu_custom_call.1} parent=1 // pred_check_branch
      %27 = sbr.rel (0) target = $region9
    $region8: #{tpu_custom_call.1} parent=1 // pred_region
      %s29 = ssub.s32 2048, 2048
      %30 = vsyncadd [#allocation6], %s29
      %s31 = sshll.u32 [#allocation5], 4
      %s32 = int_to_ptr.vmem [resolvable:$true] %s31
      %37 = dma.hbm_to_vmem [thread:$0]  %s1, 2048, %s32, [#allocation6], 128, 128, 8
    $region9: #{tpu_custom_call.1} parent=1 // pred_fallthru
      _
    // Predicated region
    $region10: #{tpu_custom_call.1} parent=1 // pred_check
      _
    $region11: #{tpu_custom_call.1} parent=1 // pred_check_branch
      %39 = sbr.rel (0) target = $region13
    $region12: #{tpu_custom_call.1} parent=1 // pred_region
      _
    $region13: #{tpu_custom_call.1} parent=1 // pred_fallthru
      _
    // Predicated region
    $region14: #{tpu_custom_call.1} parent=1 // pred_check
      _
    $region15: #{tpu_custom_call.1} parent=1 // pred_check_branch
      %41 = sbr.rel (0) target = $region17
    $region16: #{tpu_custom_call.1} parent=1 // pred_region
      _
    $region17: #{tpu_custom_call.1} parent=1 // pred_fallthru
      _
    // Predicated region
    $region18: #{tpu_custom_call.1} parent=1 // pred_check
      _
    $region19: #{tpu_custom_call.1} parent=1 // pred_check_branch
      %43 = sbr.rel (0) target = $region21
    $region20: #{tpu_custom_call.1} parent=1 // pred_region
      %44 = dma.done [#allocation3], 2048
    $region21: #{tpu_custom_call.1} parent=1 // pred_fallthru
      _
    // Predicated region
    $region22: #{tpu_custom_call.1} parent=1 // pred_check
      _
    $region23: #{tpu_custom_call.1} parent=1 // pred_check_branch
      %46 = sbr.rel (0) target = $region25
    $region24: #{tpu_custom_call.1} parent=1 // pred_region
      %47 = dma.done [#allocation6], 2048
    $region25: #{tpu_custom_call.1} parent=1 // pred_fallthru
      _
    %v48 = vld [vmem:[#allocation2] sm:$0xff]
    %v49 = vld [vmem:[#allocation2 + $0x8] sm:$0xff]
    %v50 = vld [vmem:[#allocation2 + $0x10] sm:$0xff]
    %v51 = vld [vmem:[#allocation2 + $0x18] sm:$0xff]
    %v52 = vld [vmem:[#allocation2 + $0x20] sm:$0xff]
    %v53 = vld [vmem:[#allocation2 + $0x28] sm:$0xff]
    %v54 = vld [vmem:[#allocation2 + $0x30] sm:$0xff]
    %v55 = vld [vmem:[#allocation2 + $0x38] sm:$0xff]
    %v56 = vld [vmem:[#allocation2 + $0x40] sm:$0xff]
    %v57 = vld [vmem:[#allocation2 + $0x48] sm:$0xff]
    %v58 = vld [vmem:[#allocation2 + $0x50] sm:$0xff]
    %v59 = vld [vmem:[#allocation2 + $0x58] sm:$0xff]
    %v60 = vld [vmem:[#allocation2 + $0x60] sm:$0xff]
    %v61 = vld [vmem:[#allocation2 + $0x68] sm:$0xff]
    %v62 = vld [vmem:[#allocation2 + $0x70] sm:$0xff]
    %v63 = vld [vmem:[#allocation2 + $0x78] sm:$0xff]
    %v64 = vld [vmem:[#allocation5] sm:$0xff]
    %v65 = vld [vmem:[#allocation5 + $0x8] sm:$0xff]
    %v66 = vld [vmem:[#allocation5 + $0x10] sm:$0xff]
    %v67 = vld [vmem:[#allocation5 + $0x18] sm:$0xff]
    %v68 = vld [vmem:[#allocation5 + $0x20] sm:$0xff]
    %v69 = vld [vmem:[#allocation5 + $0x28] sm:$0xff]
    %v70 = vld [vmem:[#allocation5 + $0x30] sm:$0xff]
    %v71 = vld [vmem:[#allocation5 + $0x38] sm:$0xff]
    %v72 = vld [vmem:[#allocation5 + $0x40] sm:$0xff]
    %v73 = vld [vmem:[#allocation5 + $0x48] sm:$0xff]
    %v74 = vld [vmem:[#allocation5 + $0x50] sm:$0xff]
    %v75 = vld [vmem:[#allocation5 + $0x58] sm:$0xff]
    %v76 = vld [vmem:[#allocation5 + $0x60] sm:$0xff]
    %v77 = vld [vmem:[#allocation5 + $0x68] sm:$0xff]
    %v78 = vld [vmem:[#allocation5 + $0x70] sm:$0xff]
    %v79 = vld [vmem:[#allocation5 + $0x78] sm:$0xff]
    %80 = vmatprep.subr.mxu0 0.0
    %81 = vmatpush1.msra.mxu0 %v79
    %82 = vmatprep.subr.mxu0 0.0
    %83 = vmatpush1.msra.mxu0 %v78
    %84 = vmatprep.subr.mxu0 0.0
    %85 = vmatpush1.msra.mxu0 %v77
    %86 = vmatprep.subr.mxu0 0.0
    %87 = vmatpush1.msra.mxu0 %v76
    %88 = vmatprep.subr.mxu0 0.0
    %89 = vmatpush1.msra.mxu0 %v75
    %90 = vmatprep.subr.mxu0 0.0
    %91 = vmatpush1.msra.mxu0 %v74
    %92 = vmatprep.subr.mxu0 0.0
    %93 = vmatpush1.msra.mxu0 %v73
    %94 = vmatprep.subr.mxu0 0.0
    %95 = vmatpush1.msra.mxu0 %v72
    %96 = vmatprep.subr.mxu0 0.0
    %97 = vmatpush1.msra.mxu0 %v71
    %98 = vmatprep.subr.mxu0 0.0
    %99 = vmatpush1.msra.mxu0 %v70
    %100 = vmatprep.subr.mxu0 0.0
    %101 = vmatpush1.msra.mxu0 %v69
    %102 = vmatprep.subr.mxu0 0.0
    %103 = vmatpush1.msra.mxu0 %v68
    %104 = vmatprep.subr.mxu0 0.0
    %105 = vmatpush1.msra.mxu0 %v67
    %106 = vmatprep.subr.mxu0 0.0
    %107 = vmatpush1.msra.mxu0 %v66
    %108 = vmatprep.subr.mxu0 0.0
    %109 = vmatpush1.msra.mxu0 %v65
    %110 = vmatprep.subr.mxu0 0.0
    %111 = vmatpush1.msra.mxu0 %v64
    %112 = vmatprep.subr.mxu0 0.0
    %113 = vmatpush2.msra.mxu0 0.0
    %114 = vmatprep.subr.mxu0 0.0
    %115 = vmatpush2.msra.mxu0 0.0
    %116 = vmatprep.subr.mxu0 0.0
    %117 = vmatpush2.msra.mxu0 0.0
    %118 = vmatprep.subr.mxu0 0.0
    %119 = vmatpush2.msra.mxu0 0.0
    %120 = vmatprep.subr.mxu0 0.0
    %121 = vmatpush2.msra.mxu0 0.0
    %122 = vmatprep.subr.mxu0 0.0
    %123 = vmatpush2.msra.mxu0 0.0
    %124 = vmatprep.subr.mxu0 0.0
    %125 = vmatpush2.msra.mxu0 0.0
    %126 = vmatprep.subr.mxu0 0.0
    %127 = vmatpush2.msra.mxu0 0.0
    %128 = vmatprep.subr.mxu0 0.0
    %129 = vmatpush2.msra.mxu0 0.0
    %130 = vmatprep.subr.mxu0 0.0
    %131 = vmatpush2.msra.mxu0 0.0
    %132 = vmatprep.subr.mxu0 0.0
    %133 = vmatpush2.msra.mxu0 0.0
    %134 = vmatprep.subr.mxu0 0.0
    %135 = vmatpush2.msra.mxu0 0.0
    %136 = vmatprep.subr.mxu0 0.0
    %137 = vmatpush2.msra.mxu0 0.0
    %138 = vmatprep.subr.mxu0 0.0
    %139 = vmatpush2.msra.mxu0 0.0
    %140 = vmatprep.subr.mxu0 0.0
    %141 = vmatpush2.msra.mxu0 0.0
    %142 = vmatprep.subr.mxu0 0.0
    %143 = vmatpush2.msra.mxu0 0.0
    %144 = vmatprep.mubr.f32.mxu0 0.0
    %145 = vmatmul.mubr.f32.gmra.mxu0 %v48
    %v146 = vpop.f32.mrf.mxu0
    %v147 = vadd.f32 0.0, %v146
    %v148 = vpop.f32.mrf.mxu0
    %149 = vmatprep.mubr.f32.mxu0 0.0
    %150 = vmatmul.mubr.f32.gmra.mxu0 %v49
    %v151 = vpop.f32.mrf.mxu0
    %v152 = vadd.f32 0.0, %v151
    %v153 = vpop.f32.mrf.mxu0
    %154 = vmatprep.mubr.f32.mxu0 0.0
    %155 = vmatmul.mubr.f32.gmra.mxu0 %v50
    %v156 = vpop.f32.mrf.mxu0
    %v157 = vadd.f32 0.0, %v156
    %v158 = vpop.f32.mrf.mxu0
    %159 = vmatprep.mubr.f32.mxu0 0.0
    %160 = vmatmul.mubr.f32.gmra.mxu0 %v51
    %v161 = vpop.f32.mrf.mxu0
    %v162 = vadd.f32 0.0, %v161
    %v163 = vpop.f32.mrf.mxu0
    %164 = vmatprep.mubr.f32.mxu0 0.0
    %165 = vmatmul.mubr.f32.gmra.mxu0 %v52
    %v166 = vpop.f32.mrf.mxu0
    %v167 = vadd.f32 0.0, %v166
    %v168 = vpop.f32.mrf.mxu0
    %169 = vmatprep.mubr.f32.mxu0 0.0
    %170 = vmatmul.mubr.f32.gmra.mxu0 %v53
    %v171 = vpop.f32.mrf.mxu0
    %v172 = vadd.f32 0.0, %v171
    %v173 = vpop.f32.mrf.mxu0
    %174 = vmatprep.mubr.f32.mxu0 0.0
    %175 = vmatmul.mubr.f32.gmra.mxu0 %v54
    %v176 = vpop.f32.mrf.mxu0
    %v177 = vadd.f32 0.0, %v176
    %v178 = vpop.f32.mrf.mxu0
    %179 = vmatprep.mubr.f32.mxu0 0.0
    %180 = vmatmul.mubr.f32.gmra.mxu0 %v55
    %v181 = vpop.f32.mrf.mxu0
    %v182 = vadd.f32 0.0, %v181
    %v183 = vpop.f32.mrf.mxu0
    %184 = vmatprep.mubr.f32.mxu0 0.0
    %185 = vmatmul.mubr.f32.gmra.mxu0 %v56
    %v186 = vpop.f32.mrf.mxu0
    %v187 = vadd.f32 0.0, %v186
    %v188 = vpop.f32.mrf.mxu0
    %189 = vmatprep.mubr.f32.mxu0 0.0
    %190 = vmatmul.mubr.f32.gmra.mxu0 %v57
    %v191 = vpop.f32.mrf.mxu0
    %v192 = vadd.f32 0.0, %v191
    %v193 = vpop.f32.mrf.mxu0
    %194 = vmatprep.mubr.f32.mxu0 0.0
    %195 = vmatmul.mubr.f32.gmra.mxu0 %v58
    %v196 = vpop.f32.mrf.mxu0
    %v197 = vadd.f32 0.0, %v196
    %v198 = vpop.f32.mrf.mxu0
    %199 = vmatprep.mubr.f32.mxu0 0.0
    %200 = vmatmul.mubr.f32.gmra.mxu0 %v59
    %v201 = vpop.f32.mrf.mxu0
    %v202 = vadd.f32 0.0, %v201
    %v203 = vpop.f32.mrf.mxu0
    %204 = vmatprep.mubr.f32.mxu0 0.0
    %205 = vmatmul.mubr.f32.gmra.mxu0 %v60
    %v206 = vpop.f32.mrf.mxu0
    %v207 = vadd.f32 0.0, %v206
    %v208 = vpop.f32.mrf.mxu0
    %209 = vmatprep.mubr.f32.mxu0 0.0
    %210 = vmatmul.mubr.f32.gmra.mxu0 %v61
    %v211 = vpop.f32.mrf.mxu0
    %v212 = vadd.f32 0.0, %v211
    %v213 = vpop.f32.mrf.mxu0
    %214 = vmatprep.mubr.f32.mxu0 0.0
    %215 = vmatmul.mubr.f32.gmra.mxu0 %v62
    %v216 = vpop.f32.mrf.mxu0
    %v217 = vadd.f32 0.0, %v216
    %v218 = vpop.f32.mrf.mxu0
    %219 = vmatprep.mubr.f32.mxu0 0.0
    %220 = vmatmul.mubr.f32.gmra.mxu0 %v63
    %v221 = vpop.f32.mrf.mxu0
    %v222 = vadd.f32 0.0, %v221
    %v223 = vpop.f32.mrf.mxu0
    %224 = vdwg.mxu0
    %225 = vst [vmem:[#allocation7] sm:$0xff] %v147
    %226 = vst [vmem:[#allocation7 + $0x8] sm:$0xff] %v152
    %227 = vst [vmem:[#allocation7 + $0x10] sm:$0xff] %v157
    %228 = vst [vmem:[#allocation7 + $0x18] sm:$0xff] %v162
    %229 = vst [vmem:[#allocation7 + $0x20] sm:$0xff] %v167
    %230 = vst [vmem:[#allocation7 + $0x28] sm:$0xff] %v172
    %231 = vst [vmem:[#allocation7 + $0x30] sm:$0xff] %v177
    %232 = vst [vmem:[#allocation7 + $0x38] sm:$0xff] %v182
    %233 = vst [vmem:[#allocation7 + $0x40] sm:$0xff] %v187
    %234 = vst [vmem:[#allocation7 + $0x48] sm:$0xff] %v192
    %235 = vst [vmem:[#allocation7 + $0x50] sm:$0xff] %v197
    %236 = vst [vmem:[#allocation7 + $0x58] sm:$0xff] %v202
    %237 = vst [vmem:[#allocation7 + $0x60] sm:$0xff] %v207
    %238 = vst [vmem:[#allocation7 + $0x68] sm:$0xff] %v212
    %239 = vst [vmem:[#allocation7 + $0x70] sm:$0xff] %v217
    %240 = vst [vmem:[#allocation7 + $0x78] sm:$0xff] %v222
    %v241 = vld [vmem:[%s2] sm:$0x1]
    %v243 = vlaneseq
    %v244 = vshrl.u32 %v243, 7
    %v245 = vsub.s32 0, %v244
    %v246 = vrot.slane %v241, %v245
    %v248 = vmul.f32 %v147, %v246
    %v249 = vmul.f32 %v152, %v246
    %v250 = vmul.f32 %v157, %v246
    %v251 = vmul.f32 %v162, %v246
    %v252 = vmul.f32 %v167, %v246
    %v253 = vmul.f32 %v172, %v246
    %v254 = vmul.f32 %v177, %v246
    %v255 = vmul.f32 %v182, %v246
    %v256 = vmul.f32 %v187, %v246
    %v257 = vmul.f32 %v192, %v246
    %v258 = vmul.f32 %v197, %v246
    %v259 = vmul.f32 %v202, %v246
    %v260 = vmul.f32 %v207, %v246
    %v261 = vmul.f32 %v212, %v246
    %v262 = vmul.f32 %v217, %v246
    %v263 = vmul.f32 %v222, %v246
    %264 = vadd.xlane.f32.xlu0 %v248
    %v265 = vpop.xlane.xlu0 %264
    %266 = vadd.xlane.f32.xlu0 %v249
    %v267 = vpop.xlane.xlu0 %266
    %268 = vadd.xlane.f32.xlu0 %v250
    %v269 = vpop.xlane.xlu0 %268
    %270 = vadd.xlane.f32.xlu0 %v251
    %v271 = vpop.xlane.xlu0 %270
    %272 = vadd.xlane.f32.xlu0 %v252
    %v273 = vpop.xlane.xlu0 %272
    %274 = vadd.xlane.f32.xlu0 %v253
    %v275 = vpop.xlane.xlu0 %274
    %276 = vadd.xlane.f32.xlu0 %v254
    %v277 = vpop.xlane.xlu0 %276
    %278 = vadd.xlane.f32.xlu0 %v255
    %v279 = vpop.xlane.xlu0 %278
    %280 = vadd.xlane.f32.xlu0 %v256
    %v281 = vpop.xlane.xlu0 %280
    %282 = vadd.xlane.f32.xlu0 %v257
    %v283 = vpop.xlane.xlu0 %282
    %284 = vadd.xlane.f32.xlu0 %v258
    %v285 = vpop.xlane.xlu0 %284
    %286 = vadd.xlane.f32.xlu0 %v259
    %v287 = vpop.xlane.xlu0 %286
    %288 = vadd.xlane.f32.xlu0 %v260
    %v289 = vpop.xlane.xlu0 %288
    %290 = vadd.xlane.f32.xlu0 %v261
    %v291 = vpop.xlane.xlu0 %290
    %292 = vadd.xlane.f32.xlu0 %v262
    %v293 = vpop.xlane.xlu0 %292
    %294 = vadd.xlane.f32.xlu0 %v263
    %v295 = vpop.xlane.xlu0 %294
    %vm296 = vcmask 7168
    %297 = vst.msk [vmem:[%s5] sm:$0xff] %vm296, %v265
    %298 = vst.msk [vmem:[%s5 + $0x8] sm:$0xff] %vm296, %v267
    %299 = vst.msk [vmem:[%s5 + $0x10] sm:$0xff] %vm296, %v269
    %300 = vst.msk [vmem:[%s5 + $0x18] sm:$0xff] %vm296, %v271
    %301 = vst.msk [vmem:[%s5 + $0x20] sm:$0xff] %vm296, %v273
    %302 = vst.msk [vmem:[%s5 + $0x28] sm:$0xff] %vm296, %v275
    %303 = vst.msk [vmem:[%s5 + $0x30] sm:$0xff] %vm296, %v277
    %304 = vst.msk [vmem:[%s5 + $0x38] sm:$0xff] %vm296, %v279
    %305 = vst.msk [vmem:[%s5 + $0x40] sm:$0xff] %vm296, %v281
    %306 = vst.msk [vmem:[%s5 + $0x48] sm:$0xff] %vm296, %v283
    %307 = vst.msk [vmem:[%s5 + $0x50] sm:$0xff] %vm296, %v285
    %308 = vst.msk [vmem:[%s5 + $0x58] sm:$0xff] %vm296, %v287
    %309 = vst.msk [vmem:[%s5 + $0x60] sm:$0xff] %vm296, %v289
    %310 = vst.msk [vmem:[%s5 + $0x68] sm:$0xff] %vm296, %v291
    %311 = vst.msk [vmem:[%s5 + $0x70] sm:$0xff] %vm296, %v293
    %312 = vst.msk [vmem:[%s5 + $0x78] sm:$0xff] %vm296, %v295
    %v313 = vld [vmem:[%s3] sm:$0x1]
    %v315 = vlaneseq
    %v316 = vshrl.u32 %v315, 7
    %v317 = vsub.s32 0, %v316
    %v318 = vrot.slane %v313, %v317
    %v320 = vmul.f32 %v147, %v318
    %v321 = vmul.f32 %v152, %v318
    %v322 = vmul.f32 %v157, %v318
    %v323 = vmul.f32 %v162, %v318
    %v324 = vmul.f32 %v167, %v318
    %v325 = vmul.f32 %v172, %v318
    %v326 = vmul.f32 %v177, %v318
    %v327 = vmul.f32 %v182, %v318
    %v328 = vmul.f32 %v187, %v318
    %v329 = vmul.f32 %v192, %v318
    %v330 = vmul.f32 %v197, %v318
    %v331 = vmul.f32 %v202, %v318
    %v332 = vmul.f32 %v207, %v318
    %v333 = vmul.f32 %v212, %v318
    %v334 = vmul.f32 %v217, %v318
    %v335 = vmul.f32 %v222, %v318
    %336 = vadd.xlane.f32.xlu0 %v320
    %v337 = vpop.xlane.xlu0 %336
    %338 = vadd.xlane.f32.xlu0 %v321
    %v339 = vpop.xlane.xlu0 %338
    %340 = vadd.xlane.f32.xlu0 %v322
    %v341 = vpop.xlane.xlu0 %340
    %342 = vadd.xlane.f32.xlu0 %v323
    %v343 = vpop.xlane.xlu0 %342
    %344 = vadd.xlane.f32.xlu0 %v324
    %v345 = vpop.xlane.xlu0 %344
    %346 = vadd.xlane.f32.xlu0 %v325
    %v347 = vpop.xlane.xlu0 %346
    %348 = vadd.xlane.f32.xlu0 %v326
    %v349 = vpop.xlane.xlu0 %348
    %350 = vadd.xlane.f32.xlu0 %v327
    %v351 = vpop.xlane.xlu0 %350
    %352 = vadd.xlane.f32.xlu0 %v328
    %v353 = vpop.xlane.xlu0 %352
    %354 = vadd.xlane.f32.xlu0 %v329
    %v355 = vpop.xlane.xlu0 %354
    %356 = vadd.xlane.f32.xlu0 %v330
    %v357 = vpop.xlane.xlu0 %356
    %358 = vadd.xlane.f32.xlu0 %v331
    %v359 = vpop.xlane.xlu0 %358
    %360 = vadd.xlane.f32.xlu0 %v332
    %v361 = vpop.xlane.xlu0 %360
    %362 = vadd.xlane.f32.xlu0 %v333
    %v363 = vpop.xlane.xlu0 %362
    %364 = vadd.xlane.f32.xlu0 %v334
    %v365 = vpop.xlane.xlu0 %364
    %366 = vadd.xlane.f32.xlu0 %v335
    %v367 = vpop.xlane.xlu0 %366
    %vm368 = vcmask 15368
    %369 = vst.msk [vmem:[%s5] sm:$0xff] %vm368, %v337
    %370 = vst.msk [vmem:[%s5 + $0x8] sm:$0xff] %vm368, %v339
    %371 = vst.msk [vmem:[%s5 + $0x10] sm:$0xff] %vm368, %v341
    %372 = vst.msk [vmem:[%s5 + $0x18] sm:$0xff] %vm368, %v343
    %373 = vst.msk [vmem:[%s5 + $0x20] sm:$0xff] %vm368, %v345
    %374 = vst.msk [vmem:[%s5 + $0x28] sm:$0xff] %vm368, %v347
    %375 = vst.msk [vmem:[%s5 + $0x30] sm:$0xff] %vm368, %v349
    %376 = vst.msk [vmem:[%s5 + $0x38] sm:$0xff] %vm368, %v351
    %377 = vst.msk [vmem:[%s5 + $0x40] sm:$0xff] %vm368, %v353
    %378 = vst.msk [vmem:[%s5 + $0x48] sm:$0xff] %vm368, %v355
    %379 = vst.msk [vmem:[%s5 + $0x50] sm:$0xff] %vm368, %v357
    %380 = vst.msk [vmem:[%s5 + $0x58] sm:$0xff] %vm368, %v359
    %381 = vst.msk [vmem:[%s5 + $0x60] sm:$0xff] %vm368, %v361
    %382 = vst.msk [vmem:[%s5 + $0x68] sm:$0xff] %vm368, %v363
    %383 = vst.msk [vmem:[%s5 + $0x70] sm:$0xff] %vm368, %v365
    %384 = vst.msk [vmem:[%s5 + $0x78] sm:$0xff] %vm368, %v367
    // Predicated region
    $region26: #{tpu_custom_call.1} parent=1 // pred_check
      _
    $region27: #{tpu_custom_call.1} parent=1 // pred_check_branch
      %386 = sbr.rel (0) target = $region29
    $region28: #{tpu_custom_call.1} parent=1 // pred_region
      %s388 = ssub.s32 2048, 2048
      %389 = vsyncadd [#allocation4], %s388
      %s390 = sshll.u32 [#allocation7], 4
      %s391 = int_to_ptr.vmem [resolvable:$true] %s390
      %396 = dma.vmem_to_hbm [thread:$0]  %s391, 2048, %s4, [#allocation4], 128, 128, 8
    $region29: #{tpu_custom_call.1} parent=1 // pred_fallthru
      _
    // Predicated region
    $region30: #{tpu_custom_call.1} parent=1 // pred_check
      _
    $region31: #{tpu_custom_call.1} parent=1 // pred_check_branch
      %398 = sbr.rel (0) target = $region33
    $region32: #{tpu_custom_call.1} parent=1 // pred_region
      _
    $region33: #{tpu_custom_call.1} parent=1 // pred_fallthru
      _
    // Predicated region
    $region34: #{tpu_custom_call.1} parent=1 // pred_check
      _
    $region35: #{tpu_custom_call.1} parent=1 // pred_check_branch
      %400 = sbr.rel (0) target = $region37
    $region36: #{tpu_custom_call.1} parent=1 // pred_region
      %401 = dma.done [#allocation4], 2048
    $region37: #{tpu_custom_call.1} parent=1 // pred_fallthru
      _
    // Predicated region
    $region38: #{tpu_custom_call.1} parent=1 // pred_check
      _
    $region39: #{tpu_custom_call.1} parent=1 // pred_check_branch
      %403 = sbr.rel (0) target = $region41
    $region40: #{tpu_custom_call.1} parent=1 // pred_region
      _
    $region41: #{tpu_custom_call.1} parent=1 // pred_fallthru
      _
    %404 = vsyncpa [#allocation3], 1
    %405 = vsyncpa [#allocation6], 1
    %406 = vsyncpa [#allocation4], 1

// kernel: tpu_custom_call.1
$region0: #{tpu_custom_call.1}
  #allocation0 [shape = 'u32[]', space=smem, size = 0x4, offset = 0x4, fixed_abs, tag = 'smem constant byte address 0x4 - core index']
  #allocation1 [shape = 'u32[144,128]{1,0:T(1,128)}', space=vmem, size = 0x12000, scoped, tag = 'internal scratch']
  %s0 = inlined_call_operand.hbm [shape: f32[128,128], index: 0, kind: input, shape index: {}]
  %s1 = inlined_call_operand.hbm [shape: f32[128,128], index: 1, kind: input, shape index: {}]
  %s2 = inlined_call_operand.vmem [shape: f32[1,128], index: 2, kind: input, shape index: {}]
  %s3 = inlined_call_operand.vmem [shape: f32[1,128], index: 3, kind: input, shape index: {}]
  %s4 = inlined_call_operand.hbm [shape: f32[128,128], index: 4, kind: output, shape index: {0}]
  %s5 = inlined_call_operand.vmem [shape: f32[128,2], index: 5, kind: output, shape index: {1}]
  %6 = xla_tuple %s4, %s5
  %s7 = sld [smem:[#allocation0]]
  $region42: #{tpu_custom_call.1} parent=0
    _
  %s9 = ssub.s32 1, %s7
  %s10 = scalar_select 0, %s9, %s7
  $region1: #{tpu_custom_call.1} parent=0
    #allocation2 [shape = 'u8[65536]{0}', space=vmem, size = 0x10000, scoped, tag = 'input window, operand 0, single buffered']
    #allocation3 [shape = 's32[1]{0}', space=sflag, size = 0x4, scoped, tag = 'scoped memory for tpu_custom_call.1']
    #allocation4 [shape = 's32[1]{0}', space=sflag, size = 0x4, scoped, tag = 'scoped memory for tpu_custom_call.1']
    #allocation5 [shape = 'u8[65536]{0}', space=vmem, size = 0x10000, scoped, tag = 'input window, operand 1, single buffered']
    #allocation6 [shape = 's32[1]{0}', space=sflag, size = 0x4, scoped, tag = 'scoped memory for tpu_custom_call.1']
    #allocation7 [shape = 'u8[65536]{0}', space=vmem, size = 0x10000, scoped, tag = 'output window, operand 0, single buffered']
    %11 = vsyncpa [#allocation3], 0
    %12 = vsyncpa [#allocation6], 0
    %13 = vsyncpa [#allocation4], 0
    // Predicated region
    $region2: #{tpu_custom_call.1} parent=1 // pred_check
      _
    $region3: #{tpu_custom_call.1} parent=1 // pred_check_branch
      %15 = sbr.rel (0) target = $region5
    $region4: #{tpu_custom_call.1} parent=1 // pred_region
      %s17 = ssub.s32 2048, 2048
      %18 = vsyncadd [#allocation3], %s17
      %s19 = sshll.u32 [#allocation2], 4
      %s20 = int_to_ptr.vmem [resolvable:$true] %s19
      %25 = dma.hbm_to_vmem [thread:$0]  %s0, 2048, %s20, [#allocation3], 128, 128, 8
    $region5: #{tpu_custom_call.1} parent=1 // pred_fallthru
      _
    // Predicated region
    $region6: #{tpu_custom_call.1} parent=1 // pred_check
      _
    $region7: #{tpu_custom_call.1} parent=1 // pred_check_branch
      %27 = sbr.rel (0) target = $region9
    $region8: #{tpu_custom_call.1} parent=1 // pred_region
      %s29 = ssub.s32 2048, 2048
      %30 = vsyncadd [#allocation6], %s29
      %s31 = sshll.u32 [#allocation5], 4
      %s32 = int_to_ptr.vmem [resolvable:$true] %s31
      %37 = dma.hbm_to_vmem [thread:$0]  %s1, 2048, %s32, [#allocation6], 128, 128, 8
    $region9: #{tpu_custom_call.1} parent=1 // pred_fallthru
      _
    // Predicated region
    $region10: #{tpu_custom_call.1} parent=1 // pred_check
      _
    $region11: #{tpu_custom_call.1} parent=1 // pred_check_branch
      %39 = sbr.rel (0) target = $region13
    $region12: #{tpu_custom_call.1} parent=1 // pred_region
      _
    $region13: #{tpu_custom_call.1} parent=1 // pred_fallthru
      _
    // Predicated region
    $region14: #{tpu_custom_call.1} parent=1 // pred_check
      _
    $region15: #{tpu_custom_call.1} parent=1 // pred_check_branch
      %41 = sbr.rel (0) target = $region17
    $region16: #{tpu_custom_call.1} parent=1 // pred_region
      _
    $region17: #{tpu_custom_call.1} parent=1 // pred_fallthru
      _
    // Predicated region
    $region18: #{tpu_custom_call.1} parent=1 // pred_check
      _
    $region19: #{tpu_custom_call.1} parent=1 // pred_check_branch
      %43 = sbr.rel (0) target = $region21
    $region20: #{tpu_custom_call.1} parent=1 // pred_region
      %44 = dma.done [#allocation3], 2048
    $region21: #{tpu_custom_call.1} parent=1 // pred_fallthru
      _
    // Predicated region
    $region22: #{tpu_custom_call.1} parent=1 // pred_check
      _
    $region23: #{tpu_custom_call.1} parent=1 // pred_check_branch
      %46 = sbr.rel (0) target = $region25
    $region24: #{tpu_custom_call.1} parent=1 // pred_region
      %47 = dma.done [#allocation6], 2048
    $region25: #{tpu_custom_call.1} parent=1 // pred_fallthru
      _
    %v48 = vld [vmem:[#allocation2] sm:$0xff]
    %v49 = vld [vmem:[#allocation2 + $0x8] sm:$0xff]
    %v50 = vld [vmem:[#allocation2 + $0x10] sm:$0xff]
    %v51 = vld [vmem:[#allocation2 + $0x18] sm:$0xff]
    %v52 = vld [vmem:[#allocation2 + $0x20] sm:$0xff]
    %v53 = vld [vmem:[#allocation2 + $0x28] sm:$0xff]
    %v54 = vld [vmem:[#allocation2 + $0x30] sm:$0xff]
    %v55 = vld [vmem:[#allocation2 + $0x38] sm:$0xff]
    %v56 = vld [vmem:[#allocation2 + $0x40] sm:$0xff]
    %v57 = vld [vmem:[#allocation2 + $0x48] sm:$0xff]
    %v58 = vld [vmem:[#allocation2 + $0x50] sm:$0xff]
    %v59 = vld [vmem:[#allocation2 + $0x58] sm:$0xff]
    %v60 = vld [vmem:[#allocation2 + $0x60] sm:$0xff]
    %v61 = vld [vmem:[#allocation2 + $0x68] sm:$0xff]
    %v62 = vld [vmem:[#allocation2 + $0x70] sm:$0xff]
    %v63 = vld [vmem:[#allocation2 + $0x78] sm:$0xff]
    %v64 = vld [vmem:[#allocation5] sm:$0xff]
    %v65 = vld [vmem:[#allocation5 + $0x8] sm:$0xff]
    %v66 = vld [vmem:[#allocation5 + $0x10] sm:$0xff]
    %v67 = vld [vmem:[#allocation5 + $0x18] sm:$0xff]
    %v68 = vld [vmem:[#allocation5 + $0x20] sm:$0xff]
    %v69 = vld [vmem:[#allocation5 + $0x28] sm:$0xff]
    %v70 = vld [vmem:[#allocation5 + $0x30] sm:$0xff]
    %v71 = vld [vmem:[#allocation5 + $0x38] sm:$0xff]
    %v72 = vld [vmem:[#allocation5 + $0x40] sm:$0xff]
    %v73 = vld [vmem:[#allocation5 + $0x48] sm:$0xff]
    %v74 = vld [vmem:[#allocation5 + $0x50] sm:$0xff]
    %v75 = vld [vmem:[#allocation5 + $0x58] sm:$0xff]
    %v76 = vld [vmem:[#allocation5 + $0x60] sm:$0xff]
    %v77 = vld [vmem:[#allocation5 + $0x68] sm:$0xff]
    %v78 = vld [vmem:[#allocation5 + $0x70] sm:$0xff]
    %v79 = vld [vmem:[#allocation5 + $0x78] sm:$0xff]
    %80 = vmatprep.subr.mxu0 0.0
    %81 = vmatpush1.msra.mxu0 %v79
    %82 = vmatprep.subr.mxu0 0.0
    %83 = vmatpush1.msra.mxu0 %v78
    %84 = vmatprep.subr.mxu0 0.0
    %85 = vmatpush1.msra.mxu0 %v77
    %86 = vmatprep.subr.mxu0 0.0
    %87 = vmatpush1.msra.mxu0 %v76
    %88 = vmatprep.subr.mxu0 0.0
    %89 = vmatpush1.msra.mxu0 %v75
    %90 = vmatprep.subr.mxu0 0.0
    %91 = vmatpush1.msra.mxu0 %v74
    %92 = vmatprep.subr.mxu0 0.0
    %93 = vmatpush1.msra.mxu0 %v73
    %94 = vmatprep.subr.mxu0 0.0
    %95 = vmatpush1.msra.mxu0 %v72
    %96 = vmatprep.subr.mxu0 0.0
    %97 = vmatpush1.msra.mxu0 %v71
    %98 = vmatprep.subr.mxu0 0.0
    %99 = vmatpush1.msra.mxu0 %v70
    %100 = vmatprep.subr.mxu0 0.0
    %101 = vmatpush1.msra.mxu0 %v69
    %102 = vmatprep.subr.mxu0 0.0
    %103 = vmatpush1.msra.mxu0 %v68
    %104 = vmatprep.subr.mxu0 0.0
    %105 = vmatpush1.msra.mxu0 %v67
    %106 = vmatprep.subr.mxu0 0.0
    %107 = vmatpush1.msra.mxu0 %v66
    %108 = vmatprep.subr.mxu0 0.0
    %109 = vmatpush1.msra.mxu0 %v65
    %110 = vmatprep.subr.mxu0 0.0
    %111 = vmatpush1.msra.mxu0 %v64
    %112 = vmatprep.subr.mxu0 0.0
    %113 = vmatpush2.msra.mxu0 0.0
    %114 = vmatprep.subr.mxu0 0.0
    %115 = vmatpush2.msra.mxu0 0.0
    %116 = vmatprep.subr.mxu0 0.0
    %117 = vmatpush2.msra.mxu0 0.0
    %118 = vmatprep.subr.mxu0 0.0
    %119 = vmatpush2.msra.mxu0 0.0
    %120 = vmatprep.subr.mxu0 0.0
    %121 = vmatpush2.msra.mxu0 0.0
    %122 = vmatprep.subr.mxu0 0.0
    %123 = vmatpush2.msra.mxu0 0.0
    %124 = vmatprep.subr.mxu0 0.0
    %125 = vmatpush2.msra.mxu0 0.0
    %126 = vmatprep.subr.mxu0 0.0
    %127 = vmatpush2.msra.mxu0 0.0
    %128 = vmatprep.subr.mxu0 0.0
    %129 = vmatpush2.msra.mxu0 0.0
    %130 = vmatprep.subr.mxu0 0.0
    %131 = vmatpush2.msra.mxu0 0.0
    %132 = vmatprep.subr.mxu0 0.0
    %133 = vmatpush2.msra.mxu0 0.0
    %134 = vmatprep.subr.mxu0 0.0
    %135 = vmatpush2.msra.mxu0 0.0
    %136 = vmatprep.subr.mxu0 0.0
    %137 = vmatpush2.msra.mxu0 0.0
    %138 = vmatprep.subr.mxu0 0.0
    %139 = vmatpush2.msra.mxu0 0.0
    %140 = vmatprep.subr.mxu0 0.0
    %141 = vmatpush2.msra.mxu0 0.0
    %142 = vmatprep.subr.mxu0 0.0
    %143 = vmatpush2.msra.mxu0 0.0
    %144 = vmatprep.mubr.f32.mxu0 0.0
    %145 = vmatmul.mubr.f32.gmra.mxu0 %v48
    %v146 = vpop.f32.mrf.mxu0
    %v147 = vadd.f32 0.0, %v146
    %v148 = vpop.f32.mrf.mxu0
    %149 = vmatprep.mubr.f32.mxu0 0.0
    %150 = vmatmul.mubr.f32.gmra.mxu0 %v49
    %v151 = vpop.f32.mrf.mxu0
    %v152 = vadd.f32 0.0, %v151
    %v153 = vpop.f32.mrf.mxu0
    %154 = vmatprep.mubr.f32.mxu0 0.0
    %155 = vmatmul.mubr.f32.gmra.mxu0 %v50
    %v156 = vpop.f32.mrf.mxu0
    %v157 = vadd.f32 0.0, %v156
    %v158 = vpop.f32.mrf.mxu0
    %159 = vmatprep.mubr.f32.mxu0 0.0
    %160 = vmatmul.mubr.f32.gmra.mxu0 %v51
    %v161 = vpop.f32.mrf.mxu0
    %v162 = vadd.f32 0.0, %v161
    %v163 = vpop.f32.mrf.mxu0
    %164 = vmatprep.mubr.f32.mxu0 0.0
    %165 = vmatmul.mubr.f32.gmra.mxu0 %v52
    %v166 = vpop.f32.mrf.mxu0
    %v167 = vadd.f32 0.0, %v166
    %v168 = vpop.f32.mrf.mxu0
    %169 = vmatprep.mubr.f32.mxu0 0.0
    %170 = vmatmul.mubr.f32.gmra.mxu0 %v53
    %v171 = vpop.f32.mrf.mxu0
    %v172 = vadd.f32 0.0, %v171
    %v173 = vpop.f32.mrf.mxu0
    %174 = vmatprep.mubr.f32.mxu0 0.0
    %175 = vmatmul.mubr.f32.gmra.mxu0 %v54
    %v176 = vpop.f32.mrf.mxu0
    %v177 = vadd.f32 0.0, %v176
    %v178 = vpop.f32.mrf.mxu0
    %179 = vmatprep.mubr.f32.mxu0 0.0
    %180 = vmatmul.mubr.f32.gmra.mxu0 %v55
    %v181 = vpop.f32.mrf.mxu0
    %v182 = vadd.f32 0.0, %v181
    %v183 = vpop.f32.mrf.mxu0
    %184 = vmatprep.mubr.f32.mxu0 0.0
    %185 = vmatmul.mubr.f32.gmra.mxu0 %v56
    %v186 = vpop.f32.mrf.mxu0
    %v187 = vadd.f32 0.0, %v186
    %v188 = vpop.f32.mrf.mxu0
    %189 = vmatprep.mubr.f32.mxu0 0.0
    %190 = vmatmul.mubr.f32.gmra.mxu0 %v57
    %v191 = vpop.f32.mrf.mxu0
    %v192 = vadd.f32 0.0, %v191
    %v193 = vpop.f32.mrf.mxu0
    %194 = vmatprep.mubr.f32.mxu0 0.0
    %195 = vmatmul.mubr.f32.gmra.mxu0 %v58
    %v196 = vpop.f32.mrf.mxu0
    %v197 = vadd.f32 0.0, %v196
    %v198 = vpop.f32.mrf.mxu0
    %199 = vmatprep.mubr.f32.mxu0 0.0
    %200 = vmatmul.mubr.f32.gmra.mxu0 %v59
    %v201 = vpop.f32.mrf.mxu0
    %v202 = vadd.f32 0.0, %v201
    %v203 = vpop.f32.mrf.mxu0
    %204 = vmatprep.mubr.f32.mxu0 0.0
    %205 = vmatmul.mubr.f32.gmra.mxu0 %v60
    %v206 = vpop.f32.mrf.mxu0
    %v207 = vadd.f32 0.0, %v206
    %v208 = vpop.f32.mrf.mxu0
    %209 = vmatprep.mubr.f32.mxu0 0.0
    %210 = vmatmul.mubr.f32.gmra.mxu0 %v61
    %v211 = vpop.f32.mrf.mxu0
    %v212 = vadd.f32 0.0, %v211
    %v213 = vpop.f32.mrf.mxu0
    %214 = vmatprep.mubr.f32.mxu0 0.0
    %215 = vmatmul.mubr.f32.gmra.mxu0 %v62
    %v216 = vpop.f32.mrf.mxu0
    %v217 = vadd.f32 0.0, %v216
    %v218 = vpop.f32.mrf.mxu0
    %219 = vmatprep.mubr.f32.mxu0 0.0
    %220 = vmatmul.mubr.f32.gmra.mxu0 %v63
    %v221 = vpop.f32.mrf.mxu0
    %v222 = vadd.f32 0.0, %v221
    %v223 = vpop.f32.mrf.mxu0
    %224 = vdwg.mxu0
    %225 = vst [vmem:[#allocation7] sm:$0xff] %v147
    %226 = vst [vmem:[#allocation7 + $0x8] sm:$0xff] %v152
    %227 = vst [vmem:[#allocation7 + $0x10] sm:$0xff] %v157
    %228 = vst [vmem:[#allocation7 + $0x18] sm:$0xff] %v162
    %229 = vst [vmem:[#allocation7 + $0x20] sm:$0xff] %v167
    %230 = vst [vmem:[#allocation7 + $0x28] sm:$0xff] %v172
    %231 = vst [vmem:[#allocation7 + $0x30] sm:$0xff] %v177
    %232 = vst [vmem:[#allocation7 + $0x38] sm:$0xff] %v182
    %233 = vst [vmem:[#allocation7 + $0x40] sm:$0xff] %v187
    %234 = vst [vmem:[#allocation7 + $0x48] sm:$0xff] %v192
    %235 = vst [vmem:[#allocation7 + $0x50] sm:$0xff] %v197
    %236 = vst [vmem:[#allocation7 + $0x58] sm:$0xff] %v202
    %237 = vst [vmem:[#allocation7 + $0x60] sm:$0xff] %v207
    %238 = vst [vmem:[#allocation7 + $0x68] sm:$0xff] %v212
    %239 = vst [vmem:[#allocation7 + $0x70] sm:$0xff] %v217
    %240 = vst [vmem:[#allocation7 + $0x78] sm:$0xff] %v222
    %v241 = vld [vmem:[%s2] sm:$0x1]
    %v243 = vlaneseq
    %v244 = vshrl.u32 %v243, 7
    %v245 = vsub.s32 0, %v244
    %v246 = vrot.slane %v241, %v245
    %v248 = vmul.f32 %v147, %v246
    %v249 = vmul.f32 %v152, %v246
    %v250 = vmul.f32 %v157, %v246
    %v251 = vmul.f32 %v162, %v246
    %v252 = vmul.f32 %v167, %v246
    %v253 = vmul.f32 %v172, %v246
    %v254 = vmul.f32 %v177, %v246
    %v255 = vmul.f32 %v182, %v246
    %v256 = vmul.f32 %v187, %v246
    %v257 = vmul.f32 %v192, %v246
    %v258 = vmul.f32 %v197, %v246
    %v259 = vmul.f32 %v202, %v246
    %v260 = vmul.f32 %v207, %v246
    %v261 = vmul.f32 %v212, %v246
    %v262 = vmul.f32 %v217, %v246
    %v263 = vmul.f32 %v222, %v246
    %264 = vadd.xlane.f32.xlu0 %v248
    %v265 = vpop.xlane.xlu0 %264
    %266 = vadd.xlane.f32.xlu0 %v249
    %v267 = vpop.xlane.xlu0 %266
    %268 = vadd.xlane.f32.xlu0 %v250
    %v269 = vpop.xlane.xlu0 %268
    %270 = vadd.xlane.f32.xlu0 %v251
    %v271 = vpop.xlane.xlu0 %270
    %272 = vadd.xlane.f32.xlu0 %v252
    %v273 = vpop.xlane.xlu0 %272
    %274 = vadd.xlane.f32.xlu0 %v253
    %v275 = vpop.xlane.xlu0 %274
    %276 = vadd.xlane.f32.xlu0 %v254
    %v277 = vpop.xlane.xlu0 %276
    %278 = vadd.xlane.f32.xlu0 %v255
    %v279 = vpop.xlane.xlu0 %278
    %280 = vadd.xlane.f32.xlu0 %v256
    %v281 = vpop.xlane.xlu0 %280
    %282 = vadd.xlane.f32.xlu0 %v257
    %v283 = vpop.xlane.xlu0 %282
    %284 = vadd.xlane.f32.xlu0 %v258
    %v285 = vpop.xlane.xlu0 %284
    %286 = vadd.xlane.f32.xlu0 %v259
    %v287 = vpop.xlane.xlu0 %286
    %288 = vadd.xlane.f32.xlu0 %v260
    %v289 = vpop.xlane.xlu0 %288
    %290 = vadd.xlane.f32.xlu0 %v261
    %v291 = vpop.xlane.xlu0 %290
    %292 = vadd.xlane.f32.xlu0 %v262
    %v293 = vpop.xlane.xlu0 %292
    %294 = vadd.xlane.f32.xlu0 %v263
    %v295 = vpop.xlane.xlu0 %294
    %vm296 = vcmask 7168
    %297 = vst.msk [vmem:[%s5] sm:$0xff] %vm296, %v265
    %298 = vst.msk [vmem:[%s5 + $0x8] sm:$0xff] %vm296, %v267
    %299 = vst.msk [vmem:[%s5 + $0x10] sm:$0xff] %vm296, %v269
    %300 = vst.msk [vmem:[%s5 + $0x18] sm:$0xff] %vm296, %v271
    %301 = vst.msk [vmem:[%s5 + $0x20] sm:$0xff] %vm296, %v273
    %302 = vst.msk [vmem:[%s5 + $0x28] sm:$0xff] %vm296, %v275
    %303 = vst.msk [vmem:[%s5 + $0x30] sm:$0xff] %vm296, %v277
    %304 = vst.msk [vmem:[%s5 + $0x38] sm:$0xff] %vm296, %v279
    %305 = vst.msk [vmem:[%s5 + $0x40] sm:$0xff] %vm296, %v281
    %306 = vst.msk [vmem:[%s5 + $0x48] sm:$0xff] %vm296, %v283
    %307 = vst.msk [vmem:[%s5 + $0x50] sm:$0xff] %vm296, %v285
    %308 = vst.msk [vmem:[%s5 + $0x58] sm:$0xff] %vm296, %v287
    %309 = vst.msk [vmem:[%s5 + $0x60] sm:$0xff] %vm296, %v289
    %310 = vst.msk [vmem:[%s5 + $0x68] sm:$0xff] %vm296, %v291
    %311 = vst.msk [vmem:[%s5 + $0x70] sm:$0xff] %vm296, %v293
    %312 = vst.msk [vmem:[%s5 + $0x78] sm:$0xff] %vm296, %v295
    %v313 = vld [vmem:[%s3] sm:$0x1]
    %v315 = vlaneseq
    %v316 = vshrl.u32 %v315, 7
    %v317 = vsub.s32 0, %v316
    %v318 = vrot.slane %v313, %v317
    %v320 = vmul.f32 %v147, %v318
    %v321 = vmul.f32 %v152, %v318
    %v322 = vmul.f32 %v157, %v318
    %v323 = vmul.f32 %v162, %v318
    %v324 = vmul.f32 %v167, %v318
    %v325 = vmul.f32 %v172, %v318
    %v326 = vmul.f32 %v177, %v318
    %v327 = vmul.f32 %v182, %v318
    %v328 = vmul.f32 %v187, %v318
    %v329 = vmul.f32 %v192, %v318
    %v330 = vmul.f32 %v197, %v318
    %v331 = vmul.f32 %v202, %v318
    %v332 = vmul.f32 %v207, %v318
    %v333 = vmul.f32 %v212, %v318
    %v334 = vmul.f32 %v217, %v318
    %v335 = vmul.f32 %v222, %v318
    %336 = vadd.xlane.f32.xlu0 %v320
    %v337 = vpop.xlane.xlu0 %336
    %338 = vadd.xlane.f32.xlu0 %v321
    %v339 = vpop.xlane.xlu0 %338
    %340 = vadd.xlane.f32.xlu0 %v322
    %v341 = vpop.xlane.xlu0 %340
    %342 = vadd.xlane.f32.xlu0 %v323
    %v343 = vpop.xlane.xlu0 %342
    %344 = vadd.xlane.f32.xlu0 %v324
    %v345 = vpop.xlane.xlu0 %344
    %346 = vadd.xlane.f32.xlu0 %v325
    %v347 = vpop.xlane.xlu0 %346
    %348 = vadd.xlane.f32.xlu0 %v326
    %v349 = vpop.xlane.xlu0 %348
    %350 = vadd.xlane.f32.xlu0 %v327
    %v351 = vpop.xlane.xlu0 %350
    %352 = vadd.xlane.f32.xlu0 %v328
    %v353 = vpop.xlane.xlu0 %352
    %354 = vadd.xlane.f32.xlu0 %v329
    %v355 = vpop.xlane.xlu0 %354
    %356 = vadd.xlane.f32.xlu0 %v330
    %v357 = vpop.xlane.xlu0 %356
    %358 = vadd.xlane.f32.xlu0 %v331
    %v359 = vpop.xlane.xlu0 %358
    %360 = vadd.xlane.f32.xlu0 %v332
    %v361 = vpop.xlane.xlu0 %360
    %362 = vadd.xlane.f32.xlu0 %v333
    %v363 = vpop.xlane.xlu0 %362
    %364 = vadd.xlane.f32.xlu0 %v334
    %v365 = vpop.xlane.xlu0 %364
    %366 = vadd.xlane.f32.xlu0 %v335
    %v367 = vpop.xlane.xlu0 %366
    %vm368 = vcmask 15368
    %369 = vst.msk [vmem:[%s5] sm:$0xff] %vm368, %v337
    %370 = vst.msk [vmem:[%s5 + $0x8] sm:$0xff] %vm368, %v339
    %371 = vst.msk [vmem:[%s5 + $0x10] sm:$0xff] %vm368, %v341
    %372 = vst.msk [vmem:[%s5 + $0x18] sm:$0xff] %vm368, %v343
    %373 = vst.msk [vmem:[%s5 + $0x20] sm:$0xff] %vm368, %v345
    %374 = vst.msk [vmem:[%s5 + $0x28] sm:$0xff] %vm368, %v347
    %375 = vst.msk [vmem:[%s5 + $0x30] sm:$0xff] %vm368, %v349
    %376 = vst.msk [vmem:[%s5 + $0x38] sm:$0xff] %vm368, %v351
    %377 = vst.msk [vmem:[%s5 + $0x40] sm:$0xff] %vm368, %v353
    %378 = vst.msk [vmem:[%s5 + $0x48] sm:$0xff] %vm368, %v355
    %379 = vst.msk [vmem:[%s5 + $0x50] sm:$0xff] %vm368, %v357
    %380 = vst.msk [vmem:[%s5 + $0x58] sm:$0xff] %vm368, %v359
    %381 = vst.msk [vmem:[%s5 + $0x60] sm:$0xff] %vm368, %v361
    %382 = vst.msk [vmem:[%s5 + $0x68] sm:$0xff] %vm368, %v363
    %383 = vst.msk [vmem:[%s5 + $0x70] sm:$0xff] %vm368, %v365
    %384 = vst.msk [vmem:[%s5 + $0x78] sm:$0xff] %vm368, %v367
    // Predicated region
    $region26: #{tpu_custom_call.1} parent=1 // pred_check
      _
    $region27: #{tpu_custom_call.1} parent=1 // pred_check_branch
      %386 = sbr.rel (0) target = $region29
    $region28: #{tpu_custom_call.1} parent=1 // pred_region
      %s388 = ssub.s32 2048, 2048
      %389 = vsyncadd [#allocation4], %s388
      %s390 = sshll.u32 [#allocation7], 4
      %s391 = int_to_ptr.vmem [resolvable:$true] %s390
      %396 = dma.vmem_to_hbm [thread:$0]  %s391, 2048, %s4, [#allocation4], 128, 128, 8
    $region29: #{tpu_custom_call.1} parent=1 // pred_fallthru
      _
    // Predicated region
    $region30: #{tpu_custom_call.1} parent=1 // pred_check
      _
    $region31: #{tpu_custom_call.1} parent=1 // pred_check_branch
      %398 = sbr.rel (0) target = $region33
    $region32: #{tpu_custom_call.1} parent=1 // pred_region
      _
    $region33: #{tpu_custom_call.1} parent=1 // pred_fallthru
      _
    // Predicated region
    $region34: #{tpu_custom_call.1} parent=1 // pred_check
      _
    $region35: #{tpu_custom_call.1} parent=1 // pred_check_branch
      %400 = sbr.rel (0) target = $region37
    $region36: #{tpu_custom_call.1} parent=1 // pred_region
      %401 = dma.done [#allocation4], 2048
    $region37: #{tpu_custom_call.1} parent=1 // pred_fallthru
      _
    // Predicated region
    $region38: #{tpu_custom_call.1} parent=1 // pred_check
      _
    $region39: #{tpu_custom_call.1} parent=1 // pred_check_branch
      %403 = sbr.rel (0) target = $region41
    $region40: #{tpu_custom_call.1} parent=1 // pred_region
      _
    $region41: #{tpu_custom_call.1} parent=1 // pred_fallthru
      _
    %404 = vsyncpa [#allocation3], 1
    %405 = vsyncpa [#allocation6], 1
    %406 = vsyncpa [#allocation4], 1

</llo_original>
